<compile_context>
chip_gen: v7x
topology: tpu7x:2x2x1
jax: 0.10.0
libtpu: 0.0.40
codegen_flags: <defaults>
</compile_context>

<pallas_src>
import functools

import jax
import jax.numpy as jnp
from jax.experimental import pallas as pl
from jax.experimental.pallas import tpu as pltpu


def _round_up(x, m):
    return (x + m - 1) // m * m


# ----------------------------- Pallas kernel ------------------------------ #
def fused_mlp_kernel(idx_ref, m_ref, b1_ref, w2_ref, b2_ref, w3r_ref, b3_ref, o_ref):
    """One batch tile: multi-hot embed+linear1 -> ReLU -> [BN1 folded] linear2 ->
    ReLU -> [BN2 folded] linear3 (as VPU reduce)."""
    tb, n_tables = idx_ref.shape          # (tile_batch, num_embedding_tables)
    v_pad = m_ref.shape[0]                # combined vocab, padded to 128 lanes

    # Multi-hot over the concatenated vocabulary (indices arrive pre-offset).
    lane = jax.lax.broadcasted_iota(jnp.int32, (tb, v_pad), 1)
    hit = lane == idx_ref[:, 0:1]
    for f in range(1, n_tables):                      # small static loop (F tables)
        hit = jnp.logical_or(hit, lane == idx_ref[:, f:f + 1])
    multihot = hit.astype(m_ref.dtype)                # exact 0/1 in bf16

    # (embedding concat) @ W1  ==  multihot @ (tables @ W1 blocks)   -- MXU, f32 acc
    h1 = jnp.dot(multihot, m_ref[...], preferred_element_type=jnp.float32) + b1_ref[...]
    h1 = jnp.maximum(h1, 0.0)

    # linear2 with BN1 folded into (w2, b2)
    h2 = jnp.dot(h1.astype(w2_ref.dtype), w2_ref[...],
                 preferred_element_type=jnp.float32) + b2_ref[...]
    h2 = jnp.maximum(h2, 0.0)

    # linear3 with BN2 folded; N=1 output -> VPU multiply + lane reduction (no MXU)
    o_ref[...] = jnp.sum(h2 * w3r_ref[...], axis=-1, keepdims=True) + b3_ref[...]


def fused_forward(fused, x_idx, *, tb):
    B, F = x_idx.shape
    v_pad, H1 = fused["m"].shape
    H2 = fused["w2"].shape[1]

    # Pre-offset indices into the combined vocabulary (cheap XLA add, saves VPU work).
    x_off = x_idx.astype(jnp.int32) + fused["offsets"][None, :]

    tb = _round_up(max(tb, 8), 8)
    tb_eff = min(tb, _round_up(B, 8))                 # don't over-tile tiny demo batches
    Bp = _round_up(B, tb_eff)
    if Bp != B:
        x_off = jnp.pad(x_off, ((0, Bp - B), (0, 0)))  # pad rows hit lane 0 only; discarded

    full = lambda shape: pl.BlockSpec(shape, lambda i: (0, 0))
    out = pl.pallas_call(
        fused_mlp_kernel,
        out_shape=jax.ShapeDtypeStruct((Bp, 1), jnp.float32),
        grid_spec=pltpu.PrefetchScalarGridSpec(
            num_scalar_prefetch=0,
            grid=(Bp // tb_eff,),
            in_specs=[
                pl.BlockSpec((tb_eff, F), lambda i: (i, 0)),   # indices, tiled over batch
                full((v_pad, H1)), full((1, H1)),              # fused embed@W1, b1
                full((H1, H2)), full((1, H2)),                 # BN1-folded W2, b2
                full((1, H2)), full((1, 1)),                   # BN2-folded W3 row, b3
            ],
            out_specs=pl.BlockSpec((tb_eff, 1), lambda i: (i, 0)),
        ),
        compiler_params=pltpu.CompilerParams(
            dimension_semantics=("parallel",),
            vmem_limit_bytes=32 * 1024 * 1024,
        ),
    )(x_off, fused["m"], fused["b1"], fused["w2"], fused["b2"],
      fused["w3_row"], fused["b3"])
    return out[:B, 0]                                  # matches x.squeeze()


@functools.partial(jax.jit, static_argnames=("tb",))
def my_model_forward(fused, x_idx, *, tb=512):
    # tb guidance: 512-2048 (mult. of 256) on v6e/v7x, 512-1024 (mult. of 128) on v5e.
    return fused_forward(fused, x_idx, tb=tb)


# ------------------------------- Parameters -------------------------------- #
def init_params(key, embed_spec):
    """Deterministic parameter init mirroring the PyTorch module's shapes."""
    ks = iter(jax.random.split(key, 64))
    p = {}
    p["emb_tables"] = [
        jax.random.normal(next(ks), (n, d), jnp.float32) * 0.1 for n, d in embed_spec
    ]
    em_dim = sum(d for _, d in embed_spec)

    def linear(key_w, key_b, din, dout):
        lim = 1.0 / jnp.sqrt(din)
        w = jax.random.uniform(key_w, (din, dout), jnp.float32, -lim, lim)
        b = jax.random.uniform(key_b, (1, dout), jnp.float32, -lim, lim)
        return w, b

    p["w1"], p["b1"] = linear(next(ks), next(ks), em_dim, 128)
    p["w2"], p["b2"] = linear(next(ks), next(ks), 128, 64)
    p["w3"], p["b3"] = linear(next(ks), next(ks), 64, 1)

    def bn(key_g, key_b, key_m, key_v, dim, eps=1e-5):
        gamma = 1.0 + 0.05 * jax.random.normal(key_g, (1, dim), jnp.float32)
        beta = 0.05 * jax.random.normal(key_b, (1, dim), jnp.float32)
        rmean = 0.1 * jax.random.normal(key_m, (1, dim), jnp.float32)
        rvar = 1.0 + 0.1 * jnp.abs(jax.random.normal(key_v, (1, dim), jnp.float32))
        scale = gamma / jnp.sqrt(rvar + eps)           # fold eval-mode BN into scale/shift
        shift = beta - rmean * scale
        return scale, shift

    p["s1"], p["t1"] = bn(next(ks), next(ks), next(ks), next(ks), 128)
    p["s2"], p["t2"] = bn(next(ks), next(ks), next(ks), next(ks), 64)
    return p


def fold_params(params, embed_spec, *, mxu_dtype=jnp.bfloat16):
    """Fold (embedding @ W1) and eval-mode BN into the matmul weights (one-time prep)."""
    H1 = params["w1"].shape[1]
    v_total = sum(n for n, _ in embed_spec)
    if v_total > 4096:
        raise ValueError("one-hot embedding fusion assumes a small combined vocabulary")
    v_pad = _round_up(v_total, 128)                    # lane-dense K for the first matmul

    m = jnp.zeros((v_pad, H1), jnp.float32)
    offsets, v_off, d_off = [], 0, 0
    for tbl, (n, d) in zip(params["emb_tables"], embed_spec):
        m = m.at[v_off:v_off + n].set(tbl @ params["w1"][d_off:d_off + d])
        offsets.append(v_off)
        v_off += n
        d_off += d

    w2 = params["w2"] * params["s1"].T                 # BN1 folded into linear2
    b2 = params["t1"] @ params["w2"] + params["b2"]
    w3 = params["w3"] * params["s2"].T                 # BN2 folded into linear3
    b3 = params["t2"] @ params["w3"] + params["b3"]

    return {
        "m": m.astype(mxu_dtype),
        "b1": params["b1"],
        "w2": w2.astype(mxu_dtype),
        "b2": b2,
        "w3_row": w3.T,                                # (1, H2) f32 for the VPU reduce
        "b3": b3,
        "offsets": jnp.asarray(offsets, dtype=jnp.int32),
    }


# ------------------------------- Reference -------------------------------- #
def embed_and_concat(params, x_idx):
    cols = [jnp.take(tbl, x_idx[:, i], axis=0) for i, tbl in enumerate(params["emb_tables"])]
    return jnp.concatenate(cols, axis=1)


def reference_forward(params, x_idx):
    """Pure-JAX f32 reference with identical eval-mode semantics (unfused)."""
    h = embed_and_concat(params, x_idx)
    h = jnp.maximum(h @ params["w1"] + params["b1"], 0.0) * params["s1"] + params["t1"]
    h = jnp.maximum(h @ params["w2"] + params["b2"], 0.0) * params["s2"] + params["t2"]
    return jnp.squeeze(h @ params["w3"] + params["b3"], axis=-1)


# --------------------------------- Driver ---------------------------------- #
if __name__ == "__main__":
    key = jax.random.PRNGKey(0)
    embed_spec = [(10, 8), (20, 16), (15, 8)]          # em_dim = 32, combined vocab = 45
    B = 64                                             # small demo batch (kernel pads/tiles any B)

    k_params, k_idx = jax.random.split(key)
    params = init_params(k_params, embed_spec)
    fused = fold_params(params, embed_spec)

    idx_keys = jax.random.split(k_idx, len(embed_spec))
    x_idx = jnp.stack(
        [jax.random.randint(idx_keys[i], (B,), 0, n, dtype=jnp.int32)
         for i, (n, _) in enumerate(embed_spec)],
        axis=1,
    )                                                   # (B, F) int32

    out = my_model_forward(fused, x_idx)                # default tb=512 -> single tile here
    out = jax.block_until_ready(out)

    ref = reference_forward(params, x_idx)
    assert out.shape == (B,)
    assert jnp.allclose(out, ref, atol=3e-2, rtol=3e-2), float(jnp.max(jnp.abs(out - ref)))

    print("KERNEL_OK")
</pallas_src>

<mosaic_0001>
module attributes {stable_mosaic.version = 11 : i64} {
  func.func @fused_mlp_kernel(%arg0: i32, %arg1: memref<64x3xi32, #tpu.memory_space<vmem>>, %arg2: memref<128x128xbf16, #tpu.memory_space<vmem>>, %arg3: memref<1x128xf32, #tpu.memory_space<vmem>>, %arg4: memref<128x64xbf16, #tpu.memory_space<vmem>>, %arg5: memref<1x64xf32, #tpu.memory_space<vmem>>, %arg6: memref<1x64xf32, #tpu.memory_space<vmem>>, %arg7: memref<1x1xf32, #tpu.memory_space<vmem>>, %arg8: memref<64x1xf32, #tpu.memory_space<vmem>>) attributes {dimension_semantics = [#tpu.dimension_semantics<parallel>], iteration_bounds = array<i64: 1>, scalar_prefetch = 0 : i64, scratch_operands = 0 : i64, tpu.core_type = #tpu.core_type<tc>, window_params = [{transform_indices = @transform_0, window_bounds = array<i64: 64, 3>}, {pipeline_mode = #tpu.pipeline_mode<synchronous>, transform_indices = @transform_1, window_bounds = array<i64: 128, 128>}, {pipeline_mode = #tpu.pipeline_mode<synchronous>, transform_indices = @transform_2, window_bounds = array<i64: 1, 128>}, {pipeline_mode = #tpu.pipeline_mode<synchronous>, transform_indices = @transform_3, window_bounds = array<i64: 128, 64>}, {pipeline_mode = #tpu.pipeline_mode<synchronous>, transform_indices = @transform_4, window_bounds = array<i64: 1, 64>}, {pipeline_mode = #tpu.pipeline_mode<synchronous>, transform_indices = @transform_5, window_bounds = array<i64: 1, 64>}, {pipeline_mode = #tpu.pipeline_mode<synchronous>, transform_indices = @transform_6, window_bounds = array<i64: 1, 1>}, {transform_indices = @transform_7, window_bounds = array<i64: 64, 1>}]} {
    %0 = tpu.iota {dimensions = array<i32: 1>} : vector<64x128xi32>
    %c0 = arith.constant 0 : index
    %c0_0 = arith.constant 0 : index
    %1 = vector.load %arg1[%c0, %c0_0] : memref<64x3xi32, #tpu.memory_space<vmem>>, vector<64x1xi32>
    %2 = vector.broadcast %1 : vector<64x1xi32> to vector<64x128xi32>
    %3 = arith.cmpi eq, %0, %2 : vector<64x128xi32>
    %c0_1 = arith.constant 0 : index
    %c1 = arith.constant 1 : index
    %4 = vector.load %arg1[%c0_1, %c1] : memref<64x3xi32, #tpu.memory_space<vmem>>, vector<64x1xi32>
    %5 = vector.broadcast %4 : vector<64x1xi32> to vector<64x128xi32>
    %6 = arith.cmpi eq, %0, %5 : vector<64x128xi32>
    %7 = arith.ori %3, %6 : vector<64x128xi1>
    %c0_2 = arith.constant 0 : index
    %c2 = arith.constant 2 : index
    %8 = vector.load %arg1[%c0_2, %c2] : memref<64x3xi32, #tpu.memory_space<vmem>>, vector<64x1xi32>
    %9 = vector.broadcast %8 : vector<64x1xi32> to vector<64x128xi32>
    %10 = arith.cmpi eq, %0, %9 : vector<64x128xi32>
    %11 = arith.ori %7, %10 : vector<64x128xi1>
    %12 = arith.extui %11 : vector<64x128xi1> to vector<64x128xi32>
    %13 = arith.sitofp %12 : vector<64x128xi32> to vector<64x128xf32>
    %14 = arith.truncf %13 : vector<64x128xf32> to vector<64x128xbf16>
    %c0_3 = arith.constant 0 : index
    %c0_4 = arith.constant 0 : index
    %15 = vector.load %arg2[%c0_3, %c0_4] : memref<128x128xbf16, #tpu.memory_space<vmem>>, vector<128x128xbf16>
    %cst = arith.constant dense<0.000000e+00> : vector<64x128xf32>
    %16 = tpu.matmul %14, %15, %cst {dimension_numbers = #tpu.dot_dimension_numbers<[1], [0], [0], [1], [0, 0, 1, 1], [], []>} : vector<64x128xbf16>, vector<128x128xbf16>, vector<64x128xf32> -> vector<64x128xf32>
    %c0_5 = arith.constant 0 : index
    %c0_6 = arith.constant 0 : index
    %17 = vector.load %arg3[%c0_5, %c0_6] : memref<1x128xf32, #tpu.memory_space<vmem>>, vector<1x128xf32>
    %18 = vector.broadcast %17 : vector<1x128xf32> to vector<64x128xf32>
    %19 = arith.addf %16, %18 : vector<64x128xf32>
    %cst_7 = arith.constant 0.000000e+00 : f32
    %20 = vector.broadcast %cst_7 : f32 to vector<64x128xf32>
    %21 = arith.maximumf %19, %20 : vector<64x128xf32>
    %22 = arith.truncf %21 : vector<64x128xf32> to vector<64x128xbf16>
    %c0_8 = arith.constant 0 : index
    %c0_9 = arith.constant 0 : index
    %23 = vector.load %arg4[%c0_8, %c0_9] : memref<128x64xbf16, #tpu.memory_space<vmem>>, vector<128x64xbf16>
    %cst_10 = arith.constant dense<0.000000e+00> : vector<64x64xf32>
    %24 = tpu.matmul %22, %23, %cst_10 {dimension_numbers = #tpu.dot_dimension_numbers<[1], [0], [0], [1], [0, 0, 1, 1], [], []>} : vector<64x128xbf16>, vector<128x64xbf16>, vector<64x64xf32> -> vector<64x64xf32>
    %c0_11 = arith.constant 0 : index
    %c0_12 = arith.constant 0 : index
    %25 = vector.load %arg5[%c0_11, %c0_12] : memref<1x64xf32, #tpu.memory_space<vmem>>, vector<1x64xf32>
    %26 = vector.broadcast %25 : vector<1x64xf32> to vector<64x64xf32>
    %27 = arith.addf %24, %26 : vector<64x64xf32>
    %cst_13 = arith.constant 0.000000e+00 : f32
    %28 = vector.broadcast %cst_13 : f32 to vector<64x64xf32>
    %29 = arith.maximumf %27, %28 : vector<64x64xf32>
    %c0_14 = arith.constant 0 : index
    %c0_15 = arith.constant 0 : index
    %30 = vector.load %arg6[%c0_14, %c0_15] : memref<1x64xf32, #tpu.memory_space<vmem>>, vector<1x64xf32>
    %31 = vector.broadcast %30 : vector<1x64xf32> to vector<64x64xf32>
    %32 = arith.mulf %29, %31 : vector<64x64xf32>
    %cst_16 = arith.constant dense<0.000000e+00> : vector<64xf32>
    %33 = vector.multi_reduction <add>, %32, %cst_16 [1] : vector<64x64xf32> to vector<64xf32>
    %34 = vector.shape_cast %33 : vector<64xf32> to vector<64x1xf32>
    %c0_17 = arith.constant 0 : index
    %c0_18 = arith.constant 0 : index
    %35 = vector.load %arg7[%c0_17, %c0_18] : memref<1x1xf32, #tpu.memory_space<vmem>>, vector<1x1xf32>
    %36 = vector.broadcast %35 : vector<1x1xf32> to vector<64x1xf32>
    %37 = arith.addf %34, %36 : vector<64x1xf32>
    %c0_19 = arith.constant 0 : index
    %c0_20 = arith.constant 0 : index
    %38 = vector.load %arg8[%c0_19, %c0_20] : memref<64x1xf32, #tpu.memory_space<vmem>>, vector<64x1xf32>
    tpu.vector_store %arg8[%c0_19, %c0_20], %37 {strides = array<i32>} : memref<64x1xf32, #tpu.memory_space<vmem>>, vector<64x1xf32>,
    return
  }
  func.func @transform_0(%arg0: i32) -> (i32, i32) {
    %c0_i32 = arith.constant 0 : i32
    %c0_i32_0 = arith.constant 0 : i32
    return %arg0, %c0_i32 : i32, i32
  }
  func.func @transform_1(%arg0: i32) -> (i32, i32) {
    %c0_i32 = arith.constant 0 : i32
    %c0_i32_0 = arith.constant 0 : i32
    %c0_i32_1 = arith.constant 0 : i32
    return %c0_i32, %c0_i32_0 : i32, i32
  }
  func.func @transform_2(%arg0: i32) -> (i32, i32) {
    %c0_i32 = arith.constant 0 : i32
    %c0_i32_0 = arith.constant 0 : i32
    %c0_i32_1 = arith.constant 0 : i32
    return %c0_i32, %c0_i32_0 : i32, i32
  }
  func.func @transform_3(%arg0: i32) -> (i32, i32) {
    %c0_i32 = arith.constant 0 : i32
    %c0_i32_0 = arith.constant 0 : i32
    %c0_i32_1 = arith.constant 0 : i32
    return %c0_i32, %c0_i32_0 : i32, i32
  }
  func.func @transform_4(%arg0: i32) -> (i32, i32) {
    %c0_i32 = arith.constant 0 : i32
    %c0_i32_0 = arith.constant 0 : i32
    %c0_i32_1 = arith.constant 0 : i32
    return %c0_i32, %c0_i32_0 : i32, i32
  }
  func.func @transform_5(%arg0: i32) -> (i32, i32) {
    %c0_i32 = arith.constant 0 : i32
    %c0_i32_0 = arith.constant 0 : i32
    %c0_i32_1 = arith.constant 0 : i32
    return %c0_i32, %c0_i32_0 : i32, i32
  }
  func.func @transform_6(%arg0: i32) -> (i32, i32) {
    %c0_i32 = arith.constant 0 : i32
    %c0_i32_0 = arith.constant 0 : i32
    %c0_i32_1 = arith.constant 0 : i32
    return %c0_i32, %c0_i32_0 : i32, i32
  }
  func.func @transform_7(%arg0: i32) -> (i32, i32) {
    %c0_i32 = arith.constant 0 : i32
    %c0_i32_0 = arith.constant 0 : i32
    return %arg0, %c0_i32 : i32, i32
  }
}

</mosaic_0001>

<llo_original>
// kernel: my_model_forward.1
$region0: #{my_model_forward.1}
  #allocation0 [shape = 'u32[]', space=smem, size = 0x4, offset = 0x4, fixed_abs, tag = 'smem constant byte address 0x4 - core index']
  #allocation1 [shape = 'u32[144,128]{1,0:T(1,128)}', space=vmem, size = 0x12000, scoped, tag = 'internal scratch']
  #allocation2 [shape = 'f32[1,1]{1,0:T(1,128)S(1)}', space=vmem, size = 0x200, scoped, tag = 'scoped memory for my_model_forward.1']
  %s0 = inlined_call_operand.vmem [shape: s32[64,3], index: 0, kind: input, shape index: {}]
  %s1 = inlined_call_operand.vmem [shape: bf16[128,128], index: 1, kind: input, shape index: {}]
  %s2 = inlined_call_operand.vmem [shape: f32[1,128], index: 2, kind: input, shape index: {}]
  %s3 = inlined_call_operand.vmem [shape: bf16[128,64], index: 3, kind: input, shape index: {}]
  %s4 = inlined_call_operand.vmem [shape: f32[1,64], index: 4, kind: input, shape index: {}]
  %s5 = inlined_call_operand.vmem [shape: f32[1,64], index: 5, kind: input, shape index: {}]
  %s6 = inlined_call_operand.<no memory space> [shape: f32[1,1], index: 6, kind: input, shape index: {}]
  %s7 = inlined_call_operand.vmem [shape: f32[64,1], index: 7, kind: output, shape index: {}]
  %s8 = sld [smem:[#allocation0]]
  $region38: #{my_model_forward.1} parent=0
    _
  %s10 = ssub.s32 1, %s8
  %s11 = scalar_select 0, %s10, %s8
  %v12 = vstv %s6
  %13 = vst [vmem:[#allocation2] sm:$0x1] %v12
  // Predicated region
  $region2: #{my_model_forward.1} parent=0 // pred_check
    _
  $region3: #{my_model_forward.1} parent=0 // pred_check_branch
    %15 = sbr.rel (0) target = $region5
  $region4: #{my_model_forward.1} parent=0 // pred_region
    _
  $region5: #{my_model_forward.1} parent=0 // pred_fallthru
    _
  // Predicated region
  $region6: #{my_model_forward.1} parent=0 // pred_check
    _
  $region7: #{my_model_forward.1} parent=0 // pred_check_branch
    %17 = sbr.rel (0) target = $region9
  $region8: #{my_model_forward.1} parent=0 // pred_region
    _
  $region9: #{my_model_forward.1} parent=0 // pred_fallthru
    _
  // Predicated region
  $region10: #{my_model_forward.1} parent=0 // pred_check
    _
  $region11: #{my_model_forward.1} parent=0 // pred_check_branch
    %19 = sbr.rel (0) target = $region13
  $region12: #{my_model_forward.1} parent=0 // pred_region
    _
  $region13: #{my_model_forward.1} parent=0 // pred_fallthru
    _
  // Predicated region
  $region14: #{my_model_forward.1} parent=0 // pred_check
    _
  $region15: #{my_model_forward.1} parent=0 // pred_check_branch
    %21 = sbr.rel (0) target = $region17
  $region16: #{my_model_forward.1} parent=0 // pred_region
    _
  $region17: #{my_model_forward.1} parent=0 // pred_fallthru
    _
  // Predicated region
  $region18: #{my_model_forward.1} parent=0 // pred_check
    _
  $region19: #{my_model_forward.1} parent=0 // pred_check_branch
    %23 = sbr.rel (0) target = $region21
  $region20: #{my_model_forward.1} parent=0 // pred_region
    _
  $region21: #{my_model_forward.1} parent=0 // pred_fallthru
    _
  // Predicated region
  $region22: #{my_model_forward.1} parent=0 // pred_check
    _
  $region23: #{my_model_forward.1} parent=0 // pred_check_branch
    %25 = sbr.rel (0) target = $region25
  $region24: #{my_model_forward.1} parent=0 // pred_region
    _
  $region25: #{my_model_forward.1} parent=0 // pred_fallthru
    _
  // Predicated region
  $region26: #{my_model_forward.1} parent=0 // pred_check
    _
  $region27: #{my_model_forward.1} parent=0 // pred_check_branch
    %27 = sbr.rel (0) target = $region29
  $region28: #{my_model_forward.1} parent=0 // pred_region
    _
  $region29: #{my_model_forward.1} parent=0 // pred_fallthru
    _
  %v29 = vlaneseq
  %v30 = vand.u32 %v29, 127
  %v31 = vld [vmem:[%s0] sm:$0xff]
  %v32 = vld [vmem:[%s0 + $0x8] sm:$0xff]
  %v33 = vld [vmem:[%s0 + $0x10] sm:$0xff]
  %v34 = vld [vmem:[%s0 + $0x18] sm:$0xff]
  %v35 = vld [vmem:[%s0 + $0x20] sm:$0xff]
  %v36 = vld [vmem:[%s0 + $0x28] sm:$0xff]
  %v37 = vld [vmem:[%s0 + $0x30] sm:$0xff]
  %v38 = vld [vmem:[%s0 + $0x38] sm:$0xff]
  %39 = vset.pattern.permute.xlu0 0
  %40 = vperm.xlu0 %39, %v31
  %v41 = vpop.permute.xlu0 %40
  %42 = vset.pattern.permute.xlu0 0
  %43 = vperm.xlu0 %42, %v32
  %v44 = vpop.permute.xlu0 %43
  %45 = vset.pattern.permute.xlu0 0
  %46 = vperm.xlu0 %45, %v33
  %v47 = vpop.permute.xlu0 %46
  %48 = vset.pattern.permute.xlu0 0
  %49 = vperm.xlu0 %48, %v34
  %v50 = vpop.permute.xlu0 %49
  %51 = vset.pattern.permute.xlu0 0
  %52 = vperm.xlu0 %51, %v35
  %v53 = vpop.permute.xlu0 %52
  %54 = vset.pattern.permute.xlu0 0
  %55 = vperm.xlu0 %54, %v36
  %v56 = vpop.permute.xlu0 %55
  %57 = vset.pattern.permute.xlu0 0
  %58 = vperm.xlu0 %57, %v37
  %v59 = vpop.permute.xlu0 %58
  %60 = vset.pattern.permute.xlu0 0
  %61 = vperm.xlu0 %60, %v38
  %v62 = vpop.permute.xlu0 %61
  %vm63 = vcmp.eq.s32.totalorder %v30, %v41
  %vm64 = vcmp.eq.s32.totalorder %v30, %v44
  %vm65 = vcmp.eq.s32.totalorder %v30, %v47
  %vm66 = vcmp.eq.s32.totalorder %v30, %v50
  %vm67 = vcmp.eq.s32.totalorder %v30, %v53
  %vm68 = vcmp.eq.s32.totalorder %v30, %v56
  %vm69 = vcmp.eq.s32.totalorder %v30, %v59
  %vm70 = vcmp.eq.s32.totalorder %v30, %v62
  %71 = vset.pattern.permute.xlu0 1
  %72 = vperm.xlu0 %71, %v31
  %v73 = vpop.permute.xlu0 %72
  %74 = vset.pattern.permute.xlu0 1
  %75 = vperm.xlu0 %74, %v32
  %v76 = vpop.permute.xlu0 %75
  %77 = vset.pattern.permute.xlu0 1
  %78 = vperm.xlu0 %77, %v33
  %v79 = vpop.permute.xlu0 %78
  %80 = vset.pattern.permute.xlu0 1
  %81 = vperm.xlu0 %80, %v34
  %v82 = vpop.permute.xlu0 %81
  %83 = vset.pattern.permute.xlu0 1
  %84 = vperm.xlu0 %83, %v35
  %v85 = vpop.permute.xlu0 %84
  %86 = vset.pattern.permute.xlu0 1
  %87 = vperm.xlu0 %86, %v36
  %v88 = vpop.permute.xlu0 %87
  %89 = vset.pattern.permute.xlu0 1
  %90 = vperm.xlu0 %89, %v37
  %v91 = vpop.permute.xlu0 %90
  %92 = vset.pattern.permute.xlu0 1
  %93 = vperm.xlu0 %92, %v38
  %v94 = vpop.permute.xlu0 %93
  %vm95 = vcmp.eq.s32.totalorder %v30, %v73
  %vm96 = vcmp.eq.s32.totalorder %v30, %v76
  %vm97 = vcmp.eq.s32.totalorder %v30, %v79
  %vm98 = vcmp.eq.s32.totalorder %v30, %v82
  %vm99 = vcmp.eq.s32.totalorder %v30, %v85
  %vm100 = vcmp.eq.s32.totalorder %v30, %v88
  %vm101 = vcmp.eq.s32.totalorder %v30, %v91
  %vm102 = vcmp.eq.s32.totalorder %v30, %v94
  %vm103 = vmor %vm63, %vm95
  %vm104 = vmor %vm64, %vm96
  %vm105 = vmor %vm65, %vm97
  %vm106 = vmor %vm66, %vm98
  %vm107 = vmor %vm67, %vm99
  %vm108 = vmor %vm68, %vm100
  %vm109 = vmor %vm69, %vm101
  %vm110 = vmor %vm70, %vm102
  %111 = vset.pattern.permute.xlu0 2
  %112 = vperm.xlu0 %111, %v31
  %v113 = vpop.permute.xlu0 %112
  %114 = vset.pattern.permute.xlu0 2
  %115 = vperm.xlu0 %114, %v32
  %v116 = vpop.permute.xlu0 %115
  %117 = vset.pattern.permute.xlu0 2
  %118 = vperm.xlu0 %117, %v33
  %v119 = vpop.permute.xlu0 %118
  %120 = vset.pattern.permute.xlu0 2
  %121 = vperm.xlu0 %120, %v34
  %v122 = vpop.permute.xlu0 %121
  %123 = vset.pattern.permute.xlu0 2
  %124 = vperm.xlu0 %123, %v35
  %v125 = vpop.permute.xlu0 %124
  %126 = vset.pattern.permute.xlu0 2
  %127 = vperm.xlu0 %126, %v36
  %v128 = vpop.permute.xlu0 %127
  %129 = vset.pattern.permute.xlu0 2
  %130 = vperm.xlu0 %129, %v37
  %v131 = vpop.permute.xlu0 %130
  %132 = vset.pattern.permute.xlu0 2
  %133 = vperm.xlu0 %132, %v38
  %v134 = vpop.permute.xlu0 %133
  %vm135 = vcmp.eq.s32.totalorder %v30, %v113
  %vm136 = vcmp.eq.s32.totalorder %v30, %v116
  %vm137 = vcmp.eq.s32.totalorder %v30, %v119
  %vm138 = vcmp.eq.s32.totalorder %v30, %v122
  %vm139 = vcmp.eq.s32.totalorder %v30, %v125
  %vm140 = vcmp.eq.s32.totalorder %v30, %v128
  %vm141 = vcmp.eq.s32.totalorder %v30, %v131
  %vm142 = vcmp.eq.s32.totalorder %v30, %v134
  %vm143 = vmor %vm103, %vm135
  %vm144 = vmor %vm104, %vm136
  %vm145 = vmor %vm105, %vm137
  %vm146 = vmor %vm106, %vm138
  %vm147 = vmor %vm107, %vm139
  %vm148 = vmor %vm108, %vm140
  %vm149 = vmor %vm109, %vm141
  %vm150 = vmor %vm110, %vm142
  %v151 = vsel %vm143, 1, 0
  %v152 = vsel %vm144, 1, 0
  %v153 = vsel %vm145, 1, 0
  %v154 = vsel %vm146, 1, 0
  %v155 = vsel %vm147, 1, 0
  %v156 = vsel %vm148, 1, 0
  %v157 = vsel %vm149, 1, 0
  %v158 = vsel %vm150, 1, 0
  %v159 = vcvt.s32.f32 %v151
  %v160 = vcvt.s32.f32 %v152
  %v161 = vcvt.s32.f32 %v153
  %v162 = vcvt.s32.f32 %v154
  %v163 = vcvt.s32.f32 %v155
  %v164 = vcvt.s32.f32 %v156
  %v165 = vcvt.s32.f32 %v157
  %v166 = vcvt.s32.f32 %v158
  %v167 = vpack.c.bf16 %v160, %v159
  %v168 = vpack.c.bf16 %v162, %v161
  %v169 = vpack.c.bf16 %v164, %v163
  %v170 = vpack.c.bf16 %v166, %v165
  %v171 = vld [vmem:[%s1] sm:$0xf]
  %v172 = vld [vmem:[%s1 + $0x4] sm:$0xf]
  %v173 = vld [vmem:[%s1 + $0x8] sm:$0xf]
  %v174 = vld [vmem:[%s1 + $0xc] sm:$0xf]
  %v175 = vld [vmem:[%s1 + $0x10] sm:$0xf]
  %v176 = vld [vmem:[%s1 + $0x14] sm:$0xf]
  %v177 = vld [vmem:[%s1 + $0x18] sm:$0xf]
  %v178 = vld [vmem:[%s1 + $0x1c] sm:$0xf]
  %v179 = vld [vmem:[%s1 + $0x20] sm:$0xf]
  %v180 = vld [vmem:[%s1 + $0x24] sm:$0xf]
  %v181 = vld [vmem:[%s1 + $0x28] sm:$0xf]
  %v182 = vld [vmem:[%s1 + $0x2c] sm:$0xf]
  %v183 = vld [vmem:[%s1 + $0x30] sm:$0xf]
  %v184 = vld [vmem:[%s1 + $0x34] sm:$0xf]
  %v185 = vld [vmem:[%s1 + $0x38] sm:$0xf]
  %v186 = vld [vmem:[%s1 + $0x3c] sm:$0xf]
  %v187 = vld [vmem:[%s2] sm:$0x1]
  %v189 = vlaneseq
  %v190 = vshrl.u32 %v189, 7
  %v191 = vsub.s32 0, %v190
  %v192 = vrot.slane %v187, %v191
  %v210 = vunpack.c.l.b16 %v171
  %v211 = vunpack.c.l.b16 %v172
  %v212 = vunpack.c.l.b16 %v173
  %v213 = vunpack.c.l.b16 %v174
  %v214 = vunpack.c.l.b16 %v175
  %v215 = vunpack.c.l.b16 %v176
  %v216 = vunpack.c.l.b16 %v177
  %v217 = vunpack.c.l.b16 %v178
  %v218 = vunpack.c.l.b16 %v179
  %v219 = vunpack.c.l.b16 %v180
  %v220 = vunpack.c.l.b16 %v181
  %v221 = vunpack.c.l.b16 %v182
  %v222 = vunpack.c.l.b16 %v183
  %v223 = vunpack.c.l.b16 %v184
  %v224 = vunpack.c.l.b16 %v185
  %v225 = vunpack.c.l.b16 %v186
  %v226 = vpack.c.b16 %v211, %v210
  %v227 = vpack.c.b16 %v213, %v212
  %v228 = vpack.c.b16 %v215, %v214
  %v229 = vpack.c.b16 %v217, %v216
  %v230 = vpack.c.b16 %v219, %v218
  %v231 = vpack.c.b16 %v221, %v220
  %v232 = vpack.c.b16 %v223, %v222
  %v233 = vpack.c.b16 %v225, %v224
  %242 = vmatprep.subr.bf16.mxu0 0
  %243 = vmatpush1.bf16.msra.mxu0 %v226
  %244 = vmatprep.subr.bf16.mxu0 0
  %245 = vmatpush1.bf16.msra.mxu0 %v227
  %246 = vmatprep.subr.bf16.mxu0 0
  %247 = vmatpush1.bf16.msra.mxu0 %v228
  %248 = vmatprep.subr.bf16.mxu0 0
  %249 = vmatpush1.bf16.msra.mxu0 %v229
  %250 = vmatprep.subr.bf16.mxu0 0
  %251 = vmatpush1.bf16.msra.mxu0 %v230
  %252 = vmatprep.subr.bf16.mxu0 0
  %253 = vmatpush1.bf16.msra.mxu0 %v231
  %254 = vmatprep.subr.bf16.mxu0 0
  %255 = vmatpush1.bf16.msra.mxu0 %v232
  %256 = vmatprep.subr.bf16.mxu0 0
  %257 = vmatpush1.bf16.msra.mxu0 %v233
  %258 = vmatprep.subr.bf16.mxu0 0
  %259 = vmatpush1.bf16.msra.mxu0 0
  %260 = vmatprep.subr.bf16.mxu0 0
  %261 = vmatpush1.bf16.msra.mxu0 0
  %262 = vmatprep.subr.bf16.mxu0 0
  %263 = vmatpush1.bf16.msra.mxu0 0
  %264 = vmatprep.subr.bf16.mxu0 0
  %265 = vmatpush1.bf16.msra.mxu0 0
  %266 = vmatprep.subr.bf16.mxu0 0
  %267 = vmatpush1.bf16.msra.mxu0 0
  %268 = vmatprep.subr.bf16.mxu0 0
  %269 = vmatpush1.bf16.msra.mxu0 0
  %270 = vmatprep.subr.bf16.mxu0 0
  %271 = vmatpush1.bf16.msra.mxu0 0
  %272 = vmatprep.subr.bf16.mxu0 0
  %273 = vmatpush1.bf16.msra.mxu0 0
  %274 = vmatprep.mubr.bf16.mxu0 0
  %275 = vmatmul.mubr.bf16.gmra.mrb[0].mxu0 %v167
  %v276 = vpop.f32.mrb[0].mxu0
  %v277 = vadd.f32 %v192, %v276
  %v278 = vpop.f32.mrb[0].mxu0
  %v279 = vpop.f32.mrb[0].mxu0
  %v280 = vadd.f32 %v192, %v279
  %v281 = vpop.f32.mrb[0].mxu0
  %282 = vmatprep.mubr.bf16.mxu0 0
  %283 = vmatmul.mubr.bf16.gmra.mrb[0].mxu0 %v168
  %v284 = vpop.f32.mrb[0].mxu0
  %v285 = vadd.f32 %v192, %v284
  %v286 = vpop.f32.mrb[0].mxu0
  %v287 = vpop.f32.mrb[0].mxu0
  %v288 = vadd.f32 %v192, %v287
  %v289 = vpop.f32.mrb[0].mxu0
  %290 = vmatprep.mubr.bf16.mxu0 0
  %291 = vmatmul.mubr.bf16.gmra.mrb[0].mxu0 %v169
  %v292 = vpop.f32.mrb[0].mxu0
  %v293 = vadd.f32 %v192, %v292
  %v294 = vpop.f32.mrb[0].mxu0
  %v295 = vpop.f32.mrb[0].mxu0
  %v296 = vadd.f32 %v192, %v295
  %v297 = vpop.f32.mrb[0].mxu0
  %298 = vmatprep.mubr.bf16.mxu0 0
  %299 = vmatmul.mubr.bf16.gmra.mrb[0].mxu0 %v170
  %v300 = vpop.f32.mrb[0].mxu0
  %v301 = vadd.f32 %v192, %v300
  %v302 = vpop.f32.mrb[0].mxu0
  %v303 = vpop.f32.mrb[0].mxu0
  %v304 = vadd.f32 %v192, %v303
  %v305 = vpop.f32.mrb[0].mxu0
  %306 = vdwg.mxu0
  %v307 = vmax.f32 %v277, 0.0
  %v308 = vmax.f32 %v280, 0.0
  %v309 = vmax.f32 %v285, 0.0
  %v310 = vmax.f32 %v288, 0.0
  %v311 = vmax.f32 %v293, 0.0
  %v312 = vmax.f32 %v296, 0.0
  %v313 = vmax.f32 %v301, 0.0
  %v314 = vmax.f32 %v304, 0.0
  %v315 = vpack.c.bf16 %v308, %v307
  %v316 = vpack.c.bf16 %v310, %v309
  %v317 = vpack.c.bf16 %v312, %v311
  %v318 = vpack.c.bf16 %v314, %v313
  %v319 = vld [vmem:[%s3] sm:$0xf]
  %v320 = vld [vmem:[%s3 + $0x4] sm:$0xf]
  %v321 = vld [vmem:[%s3 + $0x8] sm:$0xf]
  %v322 = vld [vmem:[%s3 + $0xc] sm:$0xf]
  %v323 = vld [vmem:[%s3 + $0x10] sm:$0xf]
  %v324 = vld [vmem:[%s3 + $0x14] sm:$0xf]
  %v325 = vld [vmem:[%s3 + $0x18] sm:$0xf]
  %v326 = vld [vmem:[%s3 + $0x1c] sm:$0xf]
  %v327 = vld [vmem:[%s3 + $0x20] sm:$0xf]
  %v328 = vld [vmem:[%s3 + $0x24] sm:$0xf]
  %v329 = vld [vmem:[%s3 + $0x28] sm:$0xf]
  %v330 = vld [vmem:[%s3 + $0x2c] sm:$0xf]
  %v331 = vld [vmem:[%s3 + $0x30] sm:$0xf]
  %v332 = vld [vmem:[%s3 + $0x34] sm:$0xf]
  %v333 = vld [vmem:[%s3 + $0x38] sm:$0xf]
  %v334 = vld [vmem:[%s3 + $0x3c] sm:$0xf]
  %v335 = vld [vmem:[%s4] sm:$0x1]
  %v337 = vlaneseq
  %v338 = vshrl.u32 %v337, 7
  %v339 = vsub.s32 0, %v338
  %v340 = vrot.slane %v335, %v339
  %v358 = vunpack.c.l.b16 %v319
  %v359 = vunpack.c.l.b16 %v320
  %v360 = vunpack.c.l.b16 %v321
  %v361 = vunpack.c.l.b16 %v322
  %v362 = vunpack.c.l.b16 %v323
  %v363 = vunpack.c.l.b16 %v324
  %v364 = vunpack.c.l.b16 %v325
  %v365 = vunpack.c.l.b16 %v326
  %v366 = vunpack.c.l.b16 %v327
  %v367 = vunpack.c.l.b16 %v328
  %v368 = vunpack.c.l.b16 %v329
  %v369 = vunpack.c.l.b16 %v330
  %v370 = vunpack.c.l.b16 %v331
  %v371 = vunpack.c.l.b16 %v332
  %v372 = vunpack.c.l.b16 %v333
  %v373 = vunpack.c.l.b16 %v334
  %v374 = vpack.c.b16 %v359, %v358
  %v375 = vpack.c.b16 %v361, %v360
  %v376 = vpack.c.b16 %v363, %v362
  %v377 = vpack.c.b16 %v365, %v364
  %v378 = vpack.c.b16 %v367, %v366
  %v379 = vpack.c.b16 %v369, %v368
  %v380 = vpack.c.b16 %v371, %v370
  %v381 = vpack.c.b16 %v373, %v372
  %390 = vmatprep.subr.bf16.mxu0 0
  %391 = vmatpush1.bf16.msra.mxu0 %v374
  %392 = vmatprep.subr.bf16.mxu0 0
  %393 = vmatpush1.bf16.msra.mxu0 %v375
  %394 = vmatprep.subr.bf16.mxu0 0
  %395 = vmatpush1.bf16.msra.mxu0 %v376
  %396 = vmatprep.subr.bf16.mxu0 0
  %397 = vmatpush1.bf16.msra.mxu0 %v377
  %398 = vmatprep.subr.bf16.mxu0 0
  %399 = vmatpush1.bf16.msra.mxu0 %v378
  %400 = vmatprep.subr.bf16.mxu0 0
  %401 = vmatpush1.bf16.msra.mxu0 %v379
  %402 = vmatprep.subr.bf16.mxu0 0
  %403 = vmatpush1.bf16.msra.mxu0 %v380
  %404 = vmatprep.subr.bf16.mxu0 0
  %405 = vmatpush1.bf16.msra.mxu0 %v381
  %406 = vmatprep.subr.bf16.mxu0 0
  %407 = vmatpush1.bf16.msra.mxu0 0
  %408 = vmatprep.subr.bf16.mxu0 0
  %409 = vmatpush1.bf16.msra.mxu0 0
  %410 = vmatprep.subr.bf16.mxu0 0
  %411 = vmatpush1.bf16.msra.mxu0 0
  %412 = vmatprep.subr.bf16.mxu0 0
  %413 = vmatpush1.bf16.msra.mxu0 0
  %414 = vmatprep.subr.bf16.mxu0 0
  %415 = vmatpush1.bf16.msra.mxu0 0
  %416 = vmatprep.subr.bf16.mxu0 0
  %417 = vmatpush1.bf16.msra.mxu0 0
  %418 = vmatprep.subr.bf16.mxu0 0
  %419 = vmatpush1.bf16.msra.mxu0 0
  %420 = vmatprep.subr.bf16.mxu0 0
  %421 = vmatpush1.bf16.msra.mxu0 0
  %422 = vmatprep.mubr.bf16.mxu0 0
  %423 = vmatmul.mubr.bf16.gmra.mrb[0].mxu0 %v315
  %v424 = vpop.f32.mrb[0].mxu0
  %v425 = vadd.f32 %v340, %v424
  %v426 = vpop.f32.mrb[0].mxu0
  %v427 = vpop.f32.mrb[0].mxu0
  %v428 = vadd.f32 %v340, %v427
  %v429 = vpop.f32.mrb[0].mxu0
  %430 = vmatprep.mubr.bf16.mxu0 0
  %431 = vmatmul.mubr.bf16.gmra.mrb[0].mxu0 %v316
  %v432 = vpop.f32.mrb[0].mxu0
  %v433 = vadd.f32 %v340, %v432
  %v434 = vpop.f32.mrb[0].mxu0
  %v435 = vpop.f32.mrb[0].mxu0
  %v436 = vadd.f32 %v340, %v435
  %v437 = vpop.f32.mrb[0].mxu0
  %438 = vmatprep.mubr.bf16.mxu0 0
  %439 = vmatmul.mubr.bf16.gmra.mrb[0].mxu0 %v317
  %v440 = vpop.f32.mrb[0].mxu0
  %v441 = vadd.f32 %v340, %v440
  %v442 = vpop.f32.mrb[0].mxu0
  %v443 = vpop.f32.mrb[0].mxu0
  %v444 = vadd.f32 %v340, %v443
  %v445 = vpop.f32.mrb[0].mxu0
  %446 = vmatprep.mubr.bf16.mxu0 0
  %447 = vmatmul.mubr.bf16.gmra.mrb[0].mxu0 %v318
  %v448 = vpop.f32.mrb[0].mxu0
  %v449 = vadd.f32 %v340, %v448
  %v450 = vpop.f32.mrb[0].mxu0
  %v451 = vpop.f32.mrb[0].mxu0
  %v452 = vadd.f32 %v340, %v451
  %v453 = vpop.f32.mrb[0].mxu0
  %454 = vdwg.mxu0
  %v455 = vmax.f32 %v425, 0.0
  %v456 = vmax.f32 %v428, 0.0
  %v457 = vmax.f32 %v433, 0.0
  %v458 = vmax.f32 %v436, 0.0
  %v459 = vmax.f32 %v441, 0.0
  %v460 = vmax.f32 %v444, 0.0
  %v461 = vmax.f32 %v449, 0.0
  %v462 = vmax.f32 %v452, 0.0
  %v463 = vld [vmem:[%s5] sm:$0x1]
  %v465 = vlaneseq
  %v466 = vshrl.u32 %v465, 7
  %v467 = vsub.s32 0, %v466
  %v468 = vrot.slane %v463, %v467
  %v470 = vmul.f32 %v455, %v468
  %v471 = vmul.f32 %v456, %v468
  %v472 = vmul.f32 %v457, %v468
  %v473 = vmul.f32 %v458, %v468
  %v474 = vmul.f32 %v459, %v468
  %v475 = vmul.f32 %v460, %v468
  %v476 = vmul.f32 %v461, %v468
  %v477 = vmul.f32 %v462, %v468
  %vm478 = vcmask 523264
  %v479 = vsel %vm478, %v470, 0.0
  %480 = vadd.xlane.f32.xlu0 %v479
  %v481 = vpop.xlane.xlu0 %480
  %v482 = vsel %vm478, %v471, 0.0
  %483 = vadd.xlane.f32.xlu0 %v482
  %v484 = vpop.xlane.xlu0 %483
  %v485 = vsel %vm478, %v472, 0.0
  %486 = vadd.xlane.f32.xlu0 %v485
  %v487 = vpop.xlane.xlu0 %486
  %v488 = vsel %vm478, %v473, 0.0
  %489 = vadd.xlane.f32.xlu0 %v488
  %v490 = vpop.xlane.xlu0 %489
  %v491 = vsel %vm478, %v474, 0.0
  %492 = vadd.xlane.f32.xlu0 %v491
  %v493 = vpop.xlane.xlu0 %492
  %v494 = vsel %vm478, %v475, 0.0
  %495 = vadd.xlane.f32.xlu0 %v494
  %v496 = vpop.xlane.xlu0 %495
  %v497 = vsel %vm478, %v476, 0.0
  %498 = vadd.xlane.f32.xlu0 %v497
  %v499 = vpop.xlane.xlu0 %498
  %v500 = vsel %vm478, %v477, 0.0
  %501 = vadd.xlane.f32.xlu0 %v500
  %v502 = vpop.xlane.xlu0 %501
  %v503 = vld [vmem:[#allocation2] sm:$0x1]
  %v505 = vlaneseq
  %v506 = vshrl.u32 %v505, 7
  %v507 = vsub.s32 0, %v506
  %v508 = vrot.slane %v503, %v507
  %v510 = vadd.f32 %v481, %v508
  %v511 = vadd.f32 %v484, %v508
  %v512 = vadd.f32 %v487, %v508
  %v513 = vadd.f32 %v490, %v508
  %v514 = vadd.f32 %v493, %v508
  %v515 = vadd.f32 %v496, %v508
  %v516 = vadd.f32 %v499, %v508
  %v517 = vadd.f32 %v502, %v508
  %vm518 = vcmask 7168
  %519 = vst.msk [vmem:[%s7] sm:$0xff] %vm518, %v510
  %520 = vst.msk [vmem:[%s7 + $0x8] sm:$0xff] %vm518, %v511
  %521 = vst.msk [vmem:[%s7 + $0x10] sm:$0xff] %vm518, %v512
  %522 = vst.msk [vmem:[%s7 + $0x18] sm:$0xff] %vm518, %v513
  %523 = vst.msk [vmem:[%s7 + $0x20] sm:$0xff] %vm518, %v514
  %524 = vst.msk [vmem:[%s7 + $0x28] sm:$0xff] %vm518, %v515
  %525 = vst.msk [vmem:[%s7 + $0x30] sm:$0xff] %vm518, %v516
  %526 = vst.msk [vmem:[%s7 + $0x38] sm:$0xff] %vm518, %v517
  // Predicated region
  $region30: #{my_model_forward.1} parent=0 // pred_check
    _
  $region31: #{my_model_forward.1} parent=0 // pred_check_branch
    %528 = sbr.rel (0) target = $region33
  $region32: #{my_model_forward.1} parent=0 // pred_region
    _
  $region33: #{my_model_forward.1} parent=0 // pred_fallthru
    _
  // Predicated region
  $region34: #{my_model_forward.1} parent=0 // pred_check
    _
  $region35: #{my_model_forward.1} parent=0 // pred_check_branch
    %530 = sbr.rel (0) target = $region37
  $region36: #{my_model_forward.1} parent=0 // pred_region
    _
  $region37: #{my_model_forward.1} parent=0 // pred_fallthru
    _

</llo_original>
